<compile_context>
chip_gen: v7x
topology: tpu7x:2x2x1
jax: 0.10.0
libtpu: 0.0.40
codegen_flags: <defaults>
</compile_context>

<pallas_src>
import functools

import jax
import jax.numpy as jnp
from jax import lax
from jax.experimental import pallas as pl
from jax.experimental.pallas import tpu as pltpu


def _round_up(x, m):
    return (x + m - 1) // m * m


def _flatten_head_kernel(x_ref, w_ref, b_ref, o_ref, acc_ref, *, k_valid):
    # x_ref: (tm, tk)  w_ref: (tk, tn)  b_ref: (1, tn) f32  o_ref: (tm, tn)
    # acc_ref: (tm, tn) f32 scratch, resident across the K grid axis.
    # k_valid: None if K tiles are exact; else number of valid K columns in
    #          the final (ragged) K tile -- static Python int.
    k = pl.program_id(2)
    nk = pl.num_programs(2)

    @pl.when(k == 0)
    def _init():
        acc_ref[...] = jnp.zeros_like(acc_ref)

    def _accumulate(masked):
        x = x_ref[...]
        w = w_ref[...]
        if masked:
            # Ragged last K tile: anything past k_valid is stale VMEM garbage
            # (possibly NaN/Inf) -> zero both operands before the MXU.
            kx = lax.broadcasted_iota(jnp.int32, x.shape, 1)
            kw = lax.broadcasted_iota(jnp.int32, w.shape, 0)
            x = jnp.where(kx < k_valid, x, jnp.zeros_like(x))
            w = jnp.where(kw < k_valid, w, jnp.zeros_like(w))
        acc_ref[...] += jnp.dot(x, w, preferred_element_type=jnp.float32)

    if k_valid is None:
        _accumulate(False)
    else:
        @pl.when(k < nk - 1)
        def _body():
            _accumulate(False)

        @pl.when(k == nk - 1)
        def _last():
            _accumulate(True)

    @pl.when(k == nk - 1)
    def _finalize():
        # Bias added once, in f32, in the finalize branch only.
        o_ref[...] = (acc_ref[...] + b_ref[...]).astype(o_ref.dtype)


def flatten_head(x, weight, bias, *, compute_dtype=jnp.bfloat16,
                 tm=512, tn=512, tk=1024,
                 full_k_vmem_bytes=20 * 1024 * 1024,
                 split_for_megacore=True):
    """FlattenHead forward.

    x: (B, n_vars, d_model, patch_num)
    weight: (target_window, nf) -- PyTorch nn.Linear layout, nf = d_model*patch_num
    bias: (target_window,)
    compute_dtype: dtype fed to the MXU (default bf16; accumulation is always
      f32).  None -> keep x.dtype (bit-exact path for f32 inputs).
    Returns (B, n_vars, target_window) in x.dtype.
    """
    B, n_vars, d_model, patch_num = x.shape
    nf = d_model * patch_num
    T, nf_w = weight.shape
    assert nf_w == nf, (weight.shape, nf)

    out_dtype = x.dtype
    cdt = x.dtype if compute_dtype is None else compute_dtype
    cds = jnp.dtype(cdt).itemsize
    ods = jnp.dtype(out_dtype).itemsize

    M = B * n_vars
    # Flatten(start_dim=-2): row-major merge of the last two dims (free reshape).
    x2d = x.reshape(M, nf)
    if x2d.dtype != cdt:
        x2d = x2d.astype(cdt)
    # One-time parameter transpose to (K, N); folded/amortized by XLA for params.
    wt = weight.T
    if wt.dtype != cdt:
        wt = wt.astype(cdt)
    b2d = bias.astype(jnp.float32).reshape(1, T)

    # ---- tile selection: minimize waste, no padding of HBM arrays ----------
    tm_r = _round_up(max(tm, 8), 8)
    tn_r = _round_up(max(tn, 128), 128)
    tm_ = M if tm_r >= M else tm_r          # full dim is legal even if not %8
    tn_ = T if tn_r >= T else tn_r          # full dim is legal even if not %128

    # v7x megacore: ensure >= 2 blocks on a parallel axis when both would be 1.
    if split_for_megacore and pl.cdiv(M, tm_) == 1 and pl.cdiv(T, tn_) == 1:
        if T > 128 and (M <= T or M <= 8):
            tn_ = _round_up(pl.cdiv(T, 2), 128)   # split N (re-streams x, smaller)
        elif M > 8:
            tm_ = _round_up(pl.cdiv(M, 2), 8)     # split M (re-streams w)

    def vmem_usage(tmx, tnx, tkx):
        return (2 * (tmx * tkx + tkx * tnx) * cds   # double-buffered x / w tiles
                + 2 * tmx * tnx * ods               # double-buffered out tile
                + tmx * tnx * 4                     # f32 accumulator scratch
                + 2 * tnx * 4)                      # bias tiles (tiny)

    # Full-K single block when it fits the budget (no K loop, no masking).
    if vmem_usage(tm_, tn_, nf) <= full_k_vmem_bytes or _round_up(tk, 128) >= nf:
        tk_ = nf
    else:
        tk_ = _round_up(tk, 128)

    grid = (pl.cdiv(M, tm_), pl.cdiv(T, tn_), pl.cdiv(nf, tk_))
    rem = nf % tk_
    k_valid = rem if rem else None

    vmem_bytes = vmem_usage(tm_, tn_, tk_)
    vmem_limit = min(max(int(vmem_bytes * 1.25) + (2 << 20), 16 << 20), 64 << 20)

    gm, gn, gk = grid
    cost = pl.CostEstimate(
        flops=2 * M * nf * T,
        transcendentals=0,
        bytes_accessed=(M * nf * cds * gn      # x re-streamed per N block
                        + nf * T * cds * gm    # w re-streamed per M block
                        + M * T * ods))        # output written once

    kernel = functools.partial(_flatten_head_kernel, k_valid=k_valid)

    out = pl.pallas_call(
        kernel,
        out_shape=jax.ShapeDtypeStruct((M, T), out_dtype),
        grid_spec=pltpu.PrefetchScalarGridSpec(
            num_scalar_prefetch=0,
            grid=grid,
            in_specs=[
                pl.BlockSpec((tm_, tk_), lambda i, j, k: (i, k)),   # x tile
                pl.BlockSpec((tk_, tn_), lambda i, j, k: (k, j)),   # w tile (K,N)
                pl.BlockSpec((1, tn_), lambda i, j, k: (0, j)),     # bias tile
            ],
            out_specs=pl.BlockSpec((tm_, tn_), lambda i, j, k: (i, j)),
            scratch_shapes=[pltpu.VMEM((tm_, tn_), jnp.float32)],
        ),
        compiler_params=pltpu.CompilerParams(
            dimension_semantics=("parallel", "parallel", "arbitrary"),
            vmem_limit_bytes=vmem_limit),
        cost_estimate=cost,
    )(x2d, wt, b2d)

    # Dropout(p=0) is identity.
    # TODO(synk): training-mode dropout (p>0) not implemented (would need
    # in-kernel pltpu.prng_seed / prng_random_bits).
    return out.reshape(B, n_vars, T)


if __name__ == "__main__":
    key = jax.random.PRNGKey(0)
    kx, kw, kb, kx2, kw2, kb2 = jax.random.split(key, 6)

    # ---- Test 1: small shapes consistent with the module (full-K fast path).
    B, n_vars, d_model, patch_num = 2, 4, 8, 4
    nf = d_model * patch_num          # 32
    target_window = 16

    x = jax.random.normal(kx, (B, n_vars, d_model, patch_num), dtype=jnp.float32)
    bound = 1.0 / (nf ** 0.5)
    weight = jax.random.uniform(kw, (target_window, nf), jnp.float32, -bound, bound)
    bias = jax.random.uniform(kb, (target_window,), jnp.float32, -bound, bound)

    ref = x.reshape(B, n_vars, nf) @ weight.T + bias

    # Default path: bf16 MXU inputs, f32 accumulation.
    out_bf16 = flatten_head(x, weight, bias)
    jax.block_until_ready(out_bf16)
    assert out_bf16.shape == (B, n_vars, target_window)
    assert jnp.allclose(out_bf16, ref, atol=5e-2, rtol=5e-2)

    # f32 MXU inputs path (tight tolerance).
    out_f32 = flatten_head(x, weight, bias, compute_dtype=jnp.float32)
    jax.block_until_ready(out_f32)
    assert out_f32.shape == (B, n_vars, target_window)
    assert jnp.allclose(out_f32, ref, atol=1e-4, rtol=1e-4)

    # ---- Test 2: ragged M / T / K with a forced K loop (masking + boundary).
    B2, nv2, dm2, pn2 = 2, 5, 10, 33          # M=10, nf=330
    nf2 = dm2 * pn2
    T2 = 200
    x2 = jax.random.normal(kx2, (B2, nv2, dm2, pn2), dtype=jnp.float32)
    bound2 = 1.0 / (nf2 ** 0.5)
    w2 = jax.random.uniform(kw2, (T2, nf2), jnp.float32, -bound2, bound2)
    b2 = jax.random.uniform(kb2, (T2,), jnp.float32, -bound2, bound2)

    ref2 = x2.reshape(B2, nv2, nf2) @ w2.T + b2
    out2 = flatten_head(x2, w2, b2, compute_dtype=jnp.float32,
                        tm=8, tn=128, tk=128, full_k_vmem_bytes=0)
    jax.block_until_ready(out2)
    assert out2.shape == (B2, nv2, T2)
    assert jnp.allclose(out2, ref2, atol=2e-4, rtol=2e-4)

    print("KERNEL_OK")
</pallas_src>

<mosaic_0001>
module attributes {stable_mosaic.version = 11 : i64} {
  func.func @_flatten_head_kernel(%arg0: i32, %arg1: i32, %arg2: i32, %arg3: memref<8x32xbf16, #tpu.memory_space<vmem>>, %arg4: memref<32x16xbf16, #tpu.memory_space<vmem>>, %arg5: memref<1x16xf32, #tpu.memory_space<vmem>>, %arg6: memref<8x16xf32, #tpu.memory_space<vmem>>, %arg7: memref<8x16xf32, #tpu.memory_space<vmem>>) attributes {dimension_semantics = [#tpu.dimension_semantics<parallel>, #tpu.dimension_semantics<parallel>, #tpu.dimension_semantics<arbitrary>], iteration_bounds = array<i64: 1, 1, 1>, scalar_prefetch = 0 : i64, scratch_operands = 1 : i64, tpu.core_type = #tpu.core_type<tc>, window_params = [{transform_indices = @transform_0, window_bounds = array<i64: 8, 32>}, {transform_indices = @transform_1, window_bounds = array<i64: 32, 16>}, {transform_indices = @transform_2, window_bounds = array<i64: 1, 16>}, {transform_indices = @transform_3, window_bounds = array<i64: 8, 16>}]} {
    %c0_i32 = arith.constant 0 : i32
    %0 = arith.cmpi eq, %arg2, %c0_i32 : i32
    %1 = arith.extui %0 : i1 to i32
    %c0_i32_0 = arith.constant 0 : i32
    %2 = arith.cmpi ne, %1, %c0_i32_0 : i32
    scf.if %2 {
      %cst_10 = arith.constant 0.000000e+00 : f32
      %12 = vector.broadcast %cst_10 : f32 to vector<8x16xf32>
      %c0_11 = arith.constant 0 : index
      %c0_12 = arith.constant 0 : index
      %13 = vector.load %arg7[%c0_11, %c0_12] : memref<8x16xf32, #tpu.memory_space<vmem>>, vector<8x16xf32>
      tpu.vector_store %arg7[%c0_11, %c0_12], %12 {strides = array<i32>} : memref<8x16xf32, #tpu.memory_space<vmem>>, vector<8x16xf32>,
    } else {
    }
    %c0 = arith.constant 0 : index
    %c0_1 = arith.constant 0 : index
    %3 = vector.load %arg3[%c0, %c0_1] : memref<8x32xbf16, #tpu.memory_space<vmem>>, vector<8x32xbf16>
    %c0_2 = arith.constant 0 : index
    %c0_3 = arith.constant 0 : index
    %4 = vector.load %arg4[%c0_2, %c0_3] : memref<32x16xbf16, #tpu.memory_space<vmem>>, vector<32x16xbf16>
    %c0_4 = arith.constant 0 : index
    %c0_5 = arith.constant 0 : index
    %5 = vector.load %arg7[%c0_4, %c0_5] : memref<8x16xf32, #tpu.memory_space<vmem>>, vector<8x16xf32>
    %cst = arith.constant dense<0.000000e+00> : vector<8x16xf32>
    %6 = tpu.matmul %3, %4, %cst {dimension_numbers = #tpu.dot_dimension_numbers<[1], [0], [0], [1], [0, 0, 1, 1], [], []>} : vector<8x32xbf16>, vector<32x16xbf16>, vector<8x16xf32> -> vector<8x16xf32>
    %7 = arith.addf %5, %6 : vector<8x16xf32>
    %c0_6 = arith.constant 0 : index
    %c0_7 = arith.constant 0 : index
    %8 = vector.load %arg7[%c0_6, %c0_7] : memref<8x16xf32, #tpu.memory_space<vmem>>, vector<8x16xf32>
    tpu.vector_store %arg7[%c0_6, %c0_7], %7 {strides = array<i32>} : memref<8x16xf32, #tpu.memory_space<vmem>>, vector<8x16xf32>,
    %c0_i32_8 = arith.constant 0 : i32
    %9 = arith.cmpi eq, %arg2, %c0_i32_8 : i32
    %10 = arith.extui %9 : i1 to i32
    %c0_i32_9 = arith.constant 0 : i32
    %11 = arith.cmpi ne, %10, %c0_i32_9 : i32
    scf.if %11 {
      %c0_10 = arith.constant 0 : index
      %c0_11 = arith.constant 0 : index
      %12 = vector.load %arg7[%c0_10, %c0_11] : memref<8x16xf32, #tpu.memory_space<vmem>>, vector<8x16xf32>
      %c0_12 = arith.constant 0 : index
      %c0_13 = arith.constant 0 : index
      %13 = vector.load %arg5[%c0_12, %c0_13] : memref<1x16xf32, #tpu.memory_space<vmem>>, vector<1x16xf32>
      %14 = vector.broadcast %13 : vector<1x16xf32> to vector<8x16xf32>
      %15 = arith.addf %12, %14 : vector<8x16xf32>
      %c0_14 = arith.constant 0 : index
      %c0_15 = arith.constant 0 : index
      %16 = vector.load %arg6[%c0_14, %c0_15] : memref<8x16xf32, #tpu.memory_space<vmem>>, vector<8x16xf32>
      tpu.vector_store %arg6[%c0_14, %c0_15], %15 {strides = array<i32>} : memref<8x16xf32, #tpu.memory_space<vmem>>, vector<8x16xf32>,
    } else {
    }
    return
  }
  func.func @transform_0(%arg0: i32, %arg1: i32, %arg2: i32) -> (i32, i32) {
    %c0_i32 = arith.constant 0 : i32
    return %arg0, %arg2 : i32, i32
  }
  func.func @transform_1(%arg0: i32, %arg1: i32, %arg2: i32) -> (i32, i32) {
    %c0_i32 = arith.constant 0 : i32
    return %arg2, %arg1 : i32, i32
  }
  func.func @transform_2(%arg0: i32, %arg1: i32, %arg2: i32) -> (i32, i32) {
    %c0_i32 = arith.constant 0 : i32
    %c0_i32_0 = arith.constant 0 : i32
    return %c0_i32, %arg1 : i32, i32
  }
  func.func @transform_3(%arg0: i32, %arg1: i32, %arg2: i32) -> (i32, i32) {
    %c0_i32 = arith.constant 0 : i32
    return %arg0, %arg1 : i32, i32
  }
}

</mosaic_0001>

<llo_original>
// kernel: tpu_custom_call.1
$region0: #{tpu_custom_call.1}
  #allocation0 [shape = 'u32[]', space=smem, size = 0x4, offset = 0x4, fixed_abs, tag = 'smem constant byte address 0x4 - core index']
  #allocation1 [shape = 'u32[144,128]{1,0:T(1,128)}', space=vmem, size = 0x12000, scoped, tag = 'internal scratch']
  #allocation2 [shape = 'f32[8,16]{1,0:T(8,128)}', space=vmem, size = 0x1000, scoped, tag = 'scratch operand']
  %s0 = inlined_call_operand.vmem [shape: bf16[8,32], index: 0, kind: input, shape index: {}]
  %s1 = inlined_call_operand.vmem [shape: bf16[32,16], index: 1, kind: input, shape index: {}]
  %s2 = inlined_call_operand.vmem [shape: f32[1,16], index: 2, kind: input, shape index: {}]
  %s3 = inlined_call_operand.hbm [shape: f32[8,16], index: 3, kind: output, shape index: {}]
  %s4 = sld [smem:[#allocation0]]
  $region30: #{tpu_custom_call.1} parent=0
    _
  %s6 = ssub.s32 1, %s4
  %s7 = scalar_select 0, %s6, %s4
  $region1: #{tpu_custom_call.1} parent=0
    #allocation3 [shape = 'u8[4096]{0}', space=vmem, size = 0x1000, scoped, tag = 'output window, operand 0, single buffered']
    #allocation4 [shape = 's32[1]{0}', space=sflag, size = 0x4, scoped, tag = 'scoped memory for tpu_custom_call.1']
    %8 = vsyncpa [#allocation4], 0
    // Predicated region
    $region2: #{tpu_custom_call.1} parent=1 // pred_check
      _
    $region3: #{tpu_custom_call.1} parent=1 // pred_check_branch
      %10 = sbr.rel (0) target = $region5
    $region4: #{tpu_custom_call.1} parent=1 // pred_region
      _
    $region5: #{tpu_custom_call.1} parent=1 // pred_fallthru
      _
    // Predicated region
    $region6: #{tpu_custom_call.1} parent=1 // pred_check
      _
    $region7: #{tpu_custom_call.1} parent=1 // pred_check_branch
      %12 = sbr.rel (0) target = $region9
    $region8: #{tpu_custom_call.1} parent=1 // pred_region
      _
    $region9: #{tpu_custom_call.1} parent=1 // pred_fallthru
      _
    // Predicated region
    $region10: #{tpu_custom_call.1} parent=1 // pred_check
      _
    $region11: #{tpu_custom_call.1} parent=1 // pred_check_branch
      %14 = sbr.rel (0) target = $region13
    $region12: #{tpu_custom_call.1} parent=1 // pred_region
      _
    $region13: #{tpu_custom_call.1} parent=1 // pred_fallthru
      _
    %p16 = scmp.eq.s32.totalorder 0, 0
    // Predicated region
    $region14: #{tpu_custom_call.1} parent=1 // pred_check
      %p17 = pneg %p16
    $region15: #{tpu_custom_call.1} parent=1 // pred_check_branch
      %19 = sbr.rel (%p17) target = $region17
    $region16: #{tpu_custom_call.1} parent=1 // pred_region
      %vm20 = vcmask 130048
      %21 = vst.msk [vmem:[#allocation2] sm:$0xff] %vm20, 0.0
    $region17: #{tpu_custom_call.1} parent=1 // pred_fallthru
      _
    %v22 = vld [vmem:[%s0] sm:$0xf]
    %v23 = vld [vmem:[%s1] sm:$0xf]
    %v24 = vld [vmem:[%s1 + $0x4] sm:$0xf]
    %v25 = vld [vmem:[%s1 + $0x8] sm:$0xf]
    %v26 = vld [vmem:[%s1 + $0xc] sm:$0xf]
    %v27 = vld [vmem:[#allocation2] sm:$0xff]
    %v32 = vunpack.c.l.b16 %v23
    %v33 = vunpack.c.l.b16 %v24
    %v34 = vunpack.c.l.b16 %v25
    %v35 = vunpack.c.l.b16 %v26
    %v36 = vpack.c.b16 %v33, %v32
    %v37 = vpack.c.b16 %v35, %v34
    %vm40 = vcmask 261120
    %v42 = vsel %vm40, %v22, 0
    %44 = vmatprep.subr.bf16.mxu0 0
    %45 = vmatpush1.bf16.msra.mxu0 %v36
    %46 = vmatprep.subr.bf16.mxu0 0
    %47 = vmatpush1.bf16.msra.mxu0 %v37
    %48 = vmatprep.subr.bf16.mxu0 0
    %49 = vmatpush1.bf16.msra.mxu0 0
    %50 = vmatprep.subr.bf16.mxu0 0
    %51 = vmatpush1.bf16.msra.mxu0 0
    %52 = vmatprep.subr.bf16.mxu0 0
    %53 = vmatpush1.bf16.msra.mxu0 0
    %54 = vmatprep.subr.bf16.mxu0 0
    %55 = vmatpush1.bf16.msra.mxu0 0
    %56 = vmatprep.subr.bf16.mxu0 0
    %57 = vmatpush1.bf16.msra.mxu0 0
    %58 = vmatprep.subr.bf16.mxu0 0
    %59 = vmatpush1.bf16.msra.mxu0 0
    %60 = vmatprep.subr.bf16.mxu0 0
    %61 = vmatpush1.bf16.msra.mxu0 0
    %62 = vmatprep.subr.bf16.mxu0 0
    %63 = vmatpush1.bf16.msra.mxu0 0
    %64 = vmatprep.subr.bf16.mxu0 0
    %65 = vmatpush1.bf16.msra.mxu0 0
    %66 = vmatprep.subr.bf16.mxu0 0
    %67 = vmatpush1.bf16.msra.mxu0 0
    %68 = vmatprep.subr.bf16.mxu0 0
    %69 = vmatpush1.bf16.msra.mxu0 0
    %70 = vmatprep.subr.bf16.mxu0 0
    %71 = vmatpush1.bf16.msra.mxu0 0
    %72 = vmatprep.subr.bf16.mxu0 0
    %73 = vmatpush1.bf16.msra.mxu0 0
    %74 = vmatprep.subr.bf16.mxu0 0
    %75 = vmatpush1.bf16.msra.mxu0 0
    %76 = vmatprep.mubr.bf16.mxu0 0
    %77 = vmatmul.mubr.bf16.gmra.mrb[0].mxu0 %v42
    %v78 = vpop.f32.mrb[0].mxu0
    %v79 = vadd.f32 0.0, %v78
    %v80 = vpop.f32.mrb[0].mxu0
    %v81 = vpop.f32.mrb[0].mxu0
    %v82 = vpop.f32.mrb[0].mxu0
    %83 = vdwg.mxu0
    %v84 = vadd.f32 %v27, %v79
    %vm85 = vcmask 130048
    %86 = vst.msk [vmem:[#allocation2] sm:$0xff] %vm85, %v84
    // Predicated region
    $region18: #{tpu_custom_call.1} parent=1 // pred_check
      %p87 = pneg %p16
    $region19: #{tpu_custom_call.1} parent=1 // pred_check_branch
      %89 = sbr.rel (%p87) target = $region21
    $region20: #{tpu_custom_call.1} parent=1 // pred_region
      %v90 = vld [vmem:[#allocation2] sm:$0xff]
      %v91 = vld [vmem:[%s2] sm:$0x1]
      %v93 = vlaneseq
      %v94 = vshrl.u32 %v93, 7
      %v95 = vsub.s32 0, %v94
      %v96 = vrot.slane %v91, %v95
      %v98 = vadd.f32 %v90, %v96
      %99 = vst.msk [vmem:[#allocation3] sm:$0xff] %vm85, %v98
    $region21: #{tpu_custom_call.1} parent=1 // pred_fallthru
      _
    // Predicated region
    $region22: #{tpu_custom_call.1} parent=1 // pred_check
      _
    $region23: #{tpu_custom_call.1} parent=1 // pred_check_branch
      %101 = sbr.rel (0) target = $region25
    $region24: #{tpu_custom_call.1} parent=1 // pred_region
      %s103 = ssub.s32 128, 128
      %104 = vsyncadd [#allocation4], %s103
      %s106 = sshll.u32 [#allocation3], 4
      %s107 = int_to_ptr.vmem [resolvable:$true] %s106
      %109 = dma.vmem_to_hbm [thread:$0]  %s107, 128, %s3, [#allocation4]
    $region25: #{tpu_custom_call.1} parent=1 // pred_fallthru
      _
    // Predicated region
    $region26: #{tpu_custom_call.1} parent=1 // pred_check
      _
    $region27: #{tpu_custom_call.1} parent=1 // pred_check_branch
      %111 = sbr.rel (0) target = $region29
    $region28: #{tpu_custom_call.1} parent=1 // pred_region
      %112 = dma.done [#allocation4], 128
    $region29: #{tpu_custom_call.1} parent=1 // pred_fallthru
      _
    %113 = vsyncpa [#allocation4], 1

</llo_original>
